<compile_context>
chip_gen: v5e
topology: v5e:2x2
jax: 0.10.0
libtpu: 0.0.40
codegen_flags: <defaults>
</compile_context>

<pallas_src>
import functools

import jax
import jax.numpy as jnp
import numpy as np
from jax.experimental import pallas as pl
from jax.experimental.pallas import tpu as pltpu


_DEFAULT_VMEM_BYTES = 64 * 1024 * 1024  # conservative (v7x-sized) fallback


def _vmem_capacity_bytes():
    try:
        info = pltpu.get_tpu_info()
        for attr in ("vmem_capacity_bytes", "vmem_bytes", "vmem_size_bytes"):
            v = getattr(info, attr, None)
            if v:
                return int(v)
    except Exception:
        pass
    return _DEFAULT_VMEM_BYTES


def _vmem_limit_bytes():
    # Stay well under the physical per-core VMEM (64 MiB on v7x, 128 MiB on
    # v5e/v6e), leaving headroom for compiler-internal scratch.
    cap = _vmem_capacity_bytes()
    return int(min(cap * 3 // 4, 100 * 1024 * 1024))


# ----------------------------------------------------------------------------
# Shared scoring math (f32 inputs, broadcastable shapes, reduces the last axis)
# ----------------------------------------------------------------------------
def _score_math(head, rel, tail, *, model_name, mode, gamma, embedding_range,
                modulus):
    if model_name == 'TransE':
        s = head + (rel - tail) if mode == 'head-batch' else head + rel - tail
        return gamma - jnp.sum(jnp.abs(s), axis=-1)

    if model_name == 'DistMult':
        s = head * (rel * tail) if mode == 'head-batch' else head * rel * tail
        return jnp.sum(s, axis=-1)

    if model_name == 'ComplEx':
        # TODO(synk): pad hidden_dim so each re/im half is 128-lane aligned (the
        # half split below crosses an (8,128) tile when d % 128 != 0).
        d = head.shape[-1] // 2
        re_h, im_h = head[..., :d], head[..., d:]
        re_r, im_r = rel[..., :d], rel[..., d:]
        re_t, im_t = tail[..., :d], tail[..., d:]
        if mode == 'head-batch':
            s = re_h * (re_r * re_t + im_r * im_t) + \
                im_h * (re_r * im_t - im_r * re_t)
        else:
            s = (re_h * re_r - im_h * im_r) * re_t + \
                (re_h * im_r + im_h * re_r) * im_t
        return jnp.sum(s, axis=-1)

    if model_name == 'RotatE':
        pi = 3.141592653589793
        d = head.shape[-1] // 2
        re_h, im_h = head[..., :d], head[..., d:]
        re_t, im_t = tail[..., :d], tail[..., d:]
        phase = rel / (embedding_range / pi)
        re_r, im_r = jnp.cos(phase), jnp.sin(phase)
        if mode == 'head-batch':
            re_s = re_r * re_t + im_r * im_t - re_h
            im_s = re_r * im_t - im_r * re_t - im_h
        else:
            re_s = re_h * re_r - im_h * im_r - re_t
            im_s = re_h * im_r + im_h * re_r - im_t
        return gamma - jnp.sum(jnp.sqrt(re_s * re_s + im_s * im_s), axis=-1)

    if model_name == 'pRotatE':
        pi = 3.1415926235897933  # NOTE: intentionally keeps the PyTorch constant
        inv = pi / embedding_range
        s = head * inv + rel * inv - tail * inv
        return gamma - jnp.sum(jnp.abs(jnp.sin(s)), axis=-1) * modulus

    if model_name == 'PairRE':
        d = rel.shape[-1] // 2
        r_h, r_t = rel[..., :d], rel[..., d:]
        # F.normalize(x, 2, -1) == x * rsqrt(max(sum(x^2), 1e-24)); rsqrt on the
        # (N,1) norm column + broadcast mul avoids N*De divisions on the EUP.
        hn = head * jax.lax.rsqrt(
            jnp.maximum(jnp.sum(head * head, axis=-1, keepdims=True), 1e-24))
        tn = tail * jax.lax.rsqrt(
            jnp.maximum(jnp.sum(tail * tail, axis=-1, keepdims=True), 1e-24))
        return gamma - jnp.sum(jnp.abs(hn * r_h - tn * r_t), axis=-1)

    raise ValueError('model %s not supported' % model_name)


# ----------------------------------------------------------------------------
# Kernel 1: fused-gather scoring (head-batch / tail-batch with negative IDs)
# ----------------------------------------------------------------------------
def _fused_score_kernel(ids_ref, single_ref, rel_ref, table_ref, o_ref,
                        neg_buf, sem, *, model_name, mode, gamma,
                        embedding_range, modulus):
    b = pl.program_id(0)
    n_neg = neg_buf.shape[0]
    base = b * n_neg

    # Gather this row's negative-entity embeddings straight from the HBM table
    # into VMEM scratch. All row-DMAs are issued back-to-back so they overlap
    # each other; the relation / singleton-entity / output tiles are still
    # auto-pipelined by their BlockSpecs.
    # TODO(synk): cross-grid-step double buffering of this gather would also
    # hide it behind the previous step's (small) compute, but needs per-core
    # priming to stay megacore-safe; kept per-step for robustness.
    @pl.loop(0, n_neg)
    def _(j):
        idx = ids_ref[base + j]
        pltpu.make_async_copy(table_ref.at[pl.ds(idx, 1)],
                              neg_buf.at[pl.ds(j, 1)],
                              sem.at[0]).start()

    @pl.loop(0, n_neg)
    def _(j):
        pltpu.make_async_copy(table_ref.at[pl.ds(0, 1)],
                              neg_buf.at[pl.ds(0, 1)],
                              sem.at[0]).wait()

    negs = neg_buf[...].astype(jnp.float32)        # (NEG, De)
    single = single_ref[0].astype(jnp.float32)     # (1,  De)
    rel = rel_ref[0].astype(jnp.float32)           # (1,  Dr)

    if mode == 'head-batch':
        head, tail = negs, single
    else:
        head, tail = single, negs

    score = _score_math(head, rel, tail, model_name=model_name, mode=mode,
                        gamma=gamma, embedding_range=embedding_range,
                        modulus=modulus)
    o_ref[0, 0, :] = score.astype(o_ref.dtype)


def kge_score_fused(neg_ids, single_entity, relation, entity_table, *,
                    model_name, mode, gamma, embedding_range, modulus=0.0):
    """Scoring with the negative-entity gather fused into the kernel."""
    B, NEG = neg_ids.shape
    _, De = entity_table.shape
    Dr = relation.shape[-1]

    single_entity = single_entity.reshape(B, 1, De)
    relation = relation.reshape(B, 1, Dr)

    vmem_limit = _vmem_limit_bytes()
    neg_bytes = NEG * De * entity_table.dtype.itemsize
    if neg_bytes > vmem_limit // 3:
        # One row of negatives does not comfortably fit VMEM scratch: fall back
        # to XLA gather + dense kernel.
        neg_emb = entity_table[neg_ids.reshape(-1)].reshape(B, NEG, De)
        if mode == 'head-batch':
            head, tail = neg_emb, single_entity
        else:
            head, tail = single_entity, neg_emb
        return kge_score_dense(head, relation, tail, model_name=model_name,
                               mode=mode, gamma=gamma,
                               embedding_range=embedding_range, modulus=modulus)

    ids_flat = neg_ids.reshape(-1).astype(jnp.int32)

    kernel = functools.partial(
        _fused_score_kernel, model_name=model_name, mode=mode,
        gamma=float(gamma), embedding_range=float(embedding_range),
        modulus=float(modulus))

    out = pl.pallas_call(
        kernel,
        out_shape=jax.ShapeDtypeStruct((B, 1, NEG), jnp.float32),
        grid_spec=pltpu.PrefetchScalarGridSpec(
            num_scalar_prefetch=1,
            grid=(B,),
            in_specs=[
                pl.BlockSpec((1, 1, De), lambda b, ids: (b, 0, 0)),
                pl.BlockSpec((1, 1, Dr), lambda b, ids: (b, 0, 0)),
                pl.BlockSpec(memory_space=pl.ANY),   # embedding table stays in HBM
            ],
            out_specs=pl.BlockSpec((1, 1, NEG), lambda b, ids: (b, 0, 0)),
            scratch_shapes=[
                pltpu.VMEM((NEG, De), entity_table.dtype),
                pltpu.SemaphoreType.DMA((1,)),
            ]),
        compiler_params=pltpu.CompilerParams(
            dimension_semantics=("parallel",),
            vmem_limit_bytes=vmem_limit),
    )(ids_flat, single_entity, relation, entity_table)
    return out[:, 0, :]


# ----------------------------------------------------------------------------
# Kernel 2: dense scoring ('single' mode / gumbel dense negatives), Bt rows/step
# ----------------------------------------------------------------------------
def _dense_score_kernel(h_ref, r_ref, t_ref, o_ref, *, model_name, mode, gamma,
                        embedding_range, modulus):
    head = h_ref[...].astype(jnp.float32)   # (Bt, Nh, De)
    rel = r_ref[...].astype(jnp.float32)    # (Bt, 1,  Dr)
    tail = t_ref[...].astype(jnp.float32)   # (Bt, Nt, De)
    score = _score_math(head, rel, tail, model_name=model_name, mode=mode,
                        gamma=gamma, embedding_range=embedding_range,
                        modulus=modulus)
    o_ref[...] = score.astype(o_ref.dtype)  # (Bt, N)


def _choose_batch_tile(B, row_bytes, budget_bytes):
    if B <= 8:
        return B
    max_rows = max(8, budget_bytes // max(1, 2 * row_bytes))  # 2x: double-buffered
    bt = min(B, max_rows, 1024)
    bt = max(8, (bt // 8) * 8)
    return bt


def _pad_batch(x, b_pad):
    b = x.shape[0]
    if b == b_pad:
        return x
    return jnp.pad(x, [(0, b_pad - b)] + [(0, 0)] * (x.ndim - 1))


def kge_score_dense(head, relation, tail, *, model_name, mode, gamma,
                    embedding_range, modulus=0.0):
    B, Nh, De = head.shape
    _, _, Dr = relation.shape
    _, Nt, Dt = tail.shape
    if Nh != 1 and Nt != 1:
        raise ValueError('at most one of head / tail may carry negatives '
                         f'(got Nh={Nh}, Nt={Nt})')
    N = max(Nh, Nt)

    itemsize = max(head.dtype.itemsize, tail.dtype.itemsize)
    row_bytes = (Nh * De + Dr + Nt * Dt) * itemsize + N * 4
    vmem_limit = _vmem_limit_bytes()
    bt = _choose_batch_tile(B, row_bytes, vmem_limit // 2)
    b_pad = ((B + bt - 1) // bt) * bt
    head = _pad_batch(head, b_pad)
    relation = _pad_batch(relation, b_pad)
    tail = _pad_batch(tail, b_pad)

    kernel = functools.partial(
        _dense_score_kernel, model_name=model_name, mode=mode,
        gamma=float(gamma), embedding_range=float(embedding_range),
        modulus=float(modulus))

    out = pl.pallas_call(
        kernel,
        out_shape=jax.ShapeDtypeStruct((b_pad, N), jnp.float32),
        grid=(b_pad // bt,),
        in_specs=[
            pl.BlockSpec((bt, Nh, De), lambda i: (i, 0, 0)),
            pl.BlockSpec((bt, 1, Dr), lambda i: (i, 0, 0)),
            pl.BlockSpec((bt, Nt, Dt), lambda i: (i, 0, 0)),
        ],
        out_specs=pl.BlockSpec((bt, N), lambda i: (i, 0)),
        compiler_params=pltpu.CompilerParams(
            dimension_semantics=("parallel",),
            vmem_limit_bytes=vmem_limit),
    )(head, relation, tail)
    return out[:B]


# ----------------------------------------------------------------------------
# Pure-JAX reference (mirrors the PyTorch module literally; correctness check)
# ----------------------------------------------------------------------------
def _score_reference(head, rel, tail, *, model_name, mode, gamma,
                     embedding_range, modulus=0.0):
    head = head.astype(jnp.float32)
    rel = rel.astype(jnp.float32)
    tail = tail.astype(jnp.float32)
    if model_name == 'TransE':
        s = head + (rel - tail) if mode == 'head-batch' else head + rel - tail
        return gamma - jnp.sum(jnp.abs(s), axis=-1)
    if model_name == 'DistMult':
        s = head * (rel * tail) if mode == 'head-batch' else head * rel * tail
        return jnp.sum(s, axis=-1)
    if model_name == 'ComplEx':
        re_h, im_h = jnp.split(head, 2, axis=-1)
        re_r, im_r = jnp.split(rel, 2, axis=-1)
        re_t, im_t = jnp.split(tail, 2, axis=-1)
        if mode == 'head-batch':
            s = re_h * (re_r * re_t + im_r * im_t) + \
                im_h * (re_r * im_t - im_r * re_t)
        else:
            s = (re_h * re_r - im_h * im_r) * re_t + \
                (re_h * im_r + im_h * re_r) * im_t
        return jnp.sum(s, axis=-1)
    if model_name == 'RotatE':
        pi = 3.141592653589793
        re_h, im_h = jnp.split(head, 2, axis=-1)
        re_t, im_t = jnp.split(tail, 2, axis=-1)
        phase = rel / (embedding_range / pi)
        re_r, im_r = jnp.cos(phase), jnp.sin(phase)
        if mode == 'head-batch':
            re_s = re_r * re_t + im_r * im_t - re_h
            im_s = re_r * im_t - im_r * re_t - im_h
        else:
            re_s = re_h * re_r - im_h * im_r - re_t
            im_s = re_h * im_r + im_h * re_r - im_t
        return gamma - jnp.sum(jnp.sqrt(re_s ** 2 + im_s ** 2), axis=-1)
    if model_name == 'pRotatE':
        pi = 3.1415926235897933
        scale = embedding_range / pi
        s = head / scale + rel / scale - tail / scale
        return gamma - jnp.sum(jnp.abs(jnp.sin(s)), axis=-1) * modulus
    if model_name == 'PairRE':
        r_h, r_t = jnp.split(rel, 2, axis=-1)
        hn = head / jnp.maximum(jnp.linalg.norm(head, axis=-1, keepdims=True), 1e-12)
        tn = tail / jnp.maximum(jnp.linalg.norm(tail, axis=-1, keepdims=True), 1e-12)
        return gamma - jnp.sum(jnp.abs(hn * r_h - tn * r_t), axis=-1)
    raise ValueError(model_name)


# ----------------------------------------------------------------------------
# Model wrapper (parameter setup + gather glue)
# ----------------------------------------------------------------------------
class KGEModel:
    def __init__(self, sample_method, model_name, nentity, nrelation, hidden_dim,
                 gamma, double_entity_embedding=False,
                 double_relation_embedding=False, key=None,
                 emb_dtype=jnp.bfloat16):
        if model_name not in ['TransE', 'DistMult', 'ComplEx', 'RotatE',
                              'pRotatE', 'PairRE']:
            raise ValueError('model %s not supported' % model_name)
        if model_name == 'RotatE' and (not double_entity_embedding or
                                       double_relation_embedding):
            raise ValueError('RotatE should use --double_entity_embedding')
        if model_name == 'ComplEx' and (not double_entity_embedding or
                                        not double_relation_embedding):
            raise ValueError('ComplEx should use double embeddings')

        self.model_name = model_name
        self.sample_method = sample_method
        self.epsilon = 2.0
        self.gamma = float(gamma)
        self.embedding_range = (self.gamma + self.epsilon) / hidden_dim
        self.entity_dim = hidden_dim * 2 if double_entity_embedding else hidden_dim
        self.relation_dim = hidden_dim * 2 if double_relation_embedding else hidden_dim

        if key is None:
            key = jax.random.PRNGKey(0)
        k_e, k_r = jax.random.split(key)
        er = self.embedding_range
        # Store embeddings in bf16: they are DMA'd as bf16 and upcast to f32
        # inside the kernels (halves HBM read bytes for a memory-bound kernel).
        self.entity_embedding = jax.random.uniform(
            k_e, (nentity, self.entity_dim), minval=-er, maxval=er,
            dtype=jnp.float32).astype(emb_dtype)
        self.relation_embedding = jax.random.uniform(
            k_r, (nrelation, self.relation_dim), minval=-er, maxval=er,
            dtype=jnp.float32).astype(emb_dtype)
        self.modulus = 0.5 * er if model_name == 'pRotatE' else 0.0

    def _score_kwargs(self):
        return dict(model_name=self.model_name, gamma=self.gamma,
                    embedding_range=self.embedding_range, modulus=self.modulus)

    def __call__(self, sample, mode, train_or_test):
        E, R = self.entity_embedding, self.relation_embedding
        kw = self._score_kwargs()
        if mode == 'single':
            head = E[sample[:, 0]][:, None, :]
            relation = R[sample[:, 1]][:, None, :]
            tail = E[sample[:, 2]][:, None, :]
            return kge_score_dense(head, relation, tail, mode=mode, **kw)
        if mode == 'head-batch':
            if self.sample_method == 'gumbel' and train_or_test == 'train':
                tail_part, head = sample
                relation = R[tail_part[:, 1]][:, None, :]
                tail = E[tail_part[:, 2]][:, None, :]
                return kge_score_dense(head, relation, tail, mode=mode, **kw)
            tail_part, head_part = sample
            relation = R[tail_part[:, 1]][:, None, :]
            tail = E[tail_part[:, 2]][:, None, :]
            return kge_score_fused(head_part, tail, relation, E, mode=mode, **kw)
        if mode == 'tail-batch':
            if self.sample_method == 'gumbel' and train_or_test == 'train':
                head_part, tail = sample
                head = E[head_part[:, 0]][:, None, :]
                relation = R[head_part[:, 1]][:, None, :]
                return kge_score_dense(head, relation, tail, mode=mode, **kw)
            head_part, tail_part = sample
            head = E[head_part[:, 0]][:, None, :]
            relation = R[head_part[:, 1]][:, None, :]
            return kge_score_fused(tail_part, head, relation, E, mode=mode, **kw)
        raise ValueError('mode %s not supported' % mode)

    def reference(self, sample, mode, train_or_test):
        E, R = self.entity_embedding, self.relation_embedding
        if mode == 'single':
            head = E[sample[:, 0]][:, None, :]
            relation = R[sample[:, 1]][:, None, :]
            tail = E[sample[:, 2]][:, None, :]
        elif mode == 'head-batch':
            if self.sample_method == 'gumbel' and train_or_test == 'train':
                tail_part, head = sample
            else:
                tail_part, head_part = sample
                b, n = head_part.shape
                head = E[head_part.reshape(-1)].reshape(b, n, -1)
            relation = R[tail_part[:, 1]][:, None, :]
            tail = E[tail_part[:, 2]][:, None, :]
        elif mode == 'tail-batch':
            if self.sample_method == 'gumbel' and train_or_test == 'train':
                head_part, tail = sample
            else:
                head_part, tail_part = sample
                b, n = tail_part.shape
                tail = E[tail_part.reshape(-1)].reshape(b, n, -1)
            head = E[head_part[:, 0]][:, None, :]
            relation = R[head_part[:, 1]][:, None, :]
        else:
            raise ValueError(mode)
        return _score_reference(head, relation, tail,
                                model_name=self.model_name, mode=mode,
                                gamma=self.gamma,
                                embedding_range=self.embedding_range,
                                modulus=self.modulus)


# ----------------------------------------------------------------------------
if __name__ == "__main__":
    key = jax.random.PRNGKey(0)
    nentity, nrelation, hidden_dim, gamma = 64, 16, 32, 12.0
    B, NEG = 4, 8

    k1, k2, k3, k4, k_model = jax.random.split(key, 5)
    positive_sample = jnp.stack([
        jax.random.randint(k1, (B,), 0, nentity),
        jax.random.randint(k2, (B,), 0, nrelation),
        jax.random.randint(k3, (B,), 0, nentity)], axis=1).astype(jnp.int32)
    negative_sample = jax.random.randint(k4, (B, NEG), 0, nentity).astype(jnp.int32)

    # (model_name, double_entity_embedding, double_relation_embedding)
    configs = [
        ('TransE', False, False),
        ('DistMult', False, False),
        ('ComplEx', True, True),
        ('RotatE', True, False),
        ('pRotatE', False, False),
        ('PairRE', False, True),
    ]

    for name, de, dr in configs:
        model = KGEModel('uniform', name, nentity, nrelation, hidden_dim, gamma,
                         double_entity_embedding=de,
                         double_relation_embedding=dr, key=k_model)
        for mode in ('single', 'head-batch', 'tail-batch'):
            sample = positive_sample if mode == 'single' else (positive_sample,
                                                               negative_sample)
            score = jax.block_until_ready(model(sample, mode, 'test'))
            ref = jax.block_until_ready(model.reference(sample, mode, 'test'))
            np.testing.assert_allclose(np.asarray(score), np.asarray(ref),
                                       rtol=1e-3, atol=1e-3)

        # gumbel-train path: dense negative embeddings (exercises the N>1 dense
        # kernel without fused gather).
        gmodel = KGEModel('gumbel', name, nentity, nrelation, hidden_dim, gamma,
                          double_entity_embedding=de,
                          double_relation_embedding=dr, key=k_model)
        dense_head = gmodel.entity_embedding[
            negative_sample.reshape(-1)].reshape(B, NEG, -1)
        gsample = (positive_sample, dense_head)
        score = jax.block_until_ready(gmodel(gsample, 'head-batch', 'train'))
        ref = jax.block_until_ready(gmodel.reference(gsample, 'head-batch', 'train'))
        np.testing.assert_allclose(np.asarray(score), np.asarray(ref),
                                   rtol=1e-3, atol=1e-3)

    print("KERNEL_OK")
</pallas_src>

<mosaic_0001>
module attributes {stable_mosaic.version = 11 : i64} {
  func.func @_dense_score_kernel(%arg0: i32, %arg1: memref<4x1x32xbf16, #tpu.memory_space<vmem>>, %arg2: memref<4x1x32xbf16, #tpu.memory_space<vmem>>, %arg3: memref<4x1x32xbf16, #tpu.memory_space<vmem>>, %arg4: memref<4x1xf32, #tpu.memory_space<vmem>>) attributes {dimension_semantics = [#tpu.dimension_semantics<parallel>], iteration_bounds = array<i64: 1>, scalar_prefetch = 0 : i64, scratch_operands = 0 : i64, tpu.core_type = #tpu.core_type<tc>, window_params = [{transform_indices = @transform_0, window_bounds = array<i64: 4, 1, 32>}, {transform_indices = @transform_1, window_bounds = array<i64: 4, 1, 32>}, {transform_indices = @transform_2, window_bounds = array<i64: 4, 1, 32>}, {transform_indices = @transform_3, window_bounds = array<i64: 4, 1>}]} {
    %c0 = arith.constant 0 : index
    %c0_0 = arith.constant 0 : index
    %c0_1 = arith.constant 0 : index
    %0 = vector.load %arg1[%c0, %c0_0, %c0_1] : memref<4x1x32xbf16, #tpu.memory_space<vmem>>, vector<4x1x32xbf16>
    %1 = arith.extf %0 : vector<4x1x32xbf16> to vector<4x1x32xf32>
    %c0_2 = arith.constant 0 : index
    %c0_3 = arith.constant 0 : index
    %c0_4 = arith.constant 0 : index
    %2 = vector.load %arg2[%c0_2, %c0_3, %c0_4] : memref<4x1x32xbf16, #tpu.memory_space<vmem>>, vector<4x1x32xbf16>
    %3 = arith.extf %2 : vector<4x1x32xbf16> to vector<4x1x32xf32>
    %c0_5 = arith.constant 0 : index
    %c0_6 = arith.constant 0 : index
    %c0_7 = arith.constant 0 : index
    %4 = vector.load %arg3[%c0_5, %c0_6, %c0_7] : memref<4x1x32xbf16, #tpu.memory_space<vmem>>, vector<4x1x32xbf16>
    %5 = arith.extf %4 : vector<4x1x32xbf16> to vector<4x1x32xf32>
    %6 = arith.addf %1, %3 : vector<4x1x32xf32>
    %7 = arith.subf %6, %5 : vector<4x1x32xf32>
    %8 = math.absf %7 : vector<4x1x32xf32>
    %cst = arith.constant dense<0.000000e+00> : vector<4x1xf32>
    %9 = vector.multi_reduction <add>, %8, %cst [2] : vector<4x1x32xf32> to vector<4x1xf32>
    %cst_8 = arith.constant 1.200000e+01 : f32
    %10 = vector.broadcast %cst_8 : f32 to vector<4x1xf32>
    %11 = arith.subf %10, %9 : vector<4x1xf32>
    %c0_9 = arith.constant 0 : index
    %c0_10 = arith.constant 0 : index
    %12 = vector.load %arg4[%c0_9, %c0_10] : memref<4x1xf32, #tpu.memory_space<vmem>>, vector<4x1xf32>
    tpu.vector_store %arg4[%c0_9, %c0_10], %11 {strides = array<i32>} : memref<4x1xf32, #tpu.memory_space<vmem>>, vector<4x1xf32>,
    return
  }
  func.func @transform_0(%arg0: i32) -> (i32, i32, i32) {
    %c0_i32 = arith.constant 0 : i32
    %c0_i32_0 = arith.constant 0 : i32
    %c0_i32_1 = arith.constant 0 : i32
    return %arg0, %c0_i32, %c0_i32_0 : i32, i32, i32
  }
  func.func @transform_1(%arg0: i32) -> (i32, i32, i32) {
    %c0_i32 = arith.constant 0 : i32
    %c0_i32_0 = arith.constant 0 : i32
    %c0_i32_1 = arith.constant 0 : i32
    return %arg0, %c0_i32, %c0_i32_0 : i32, i32, i32
  }
  func.func @transform_2(%arg0: i32) -> (i32, i32, i32) {
    %c0_i32 = arith.constant 0 : i32
    %c0_i32_0 = arith.constant 0 : i32
    %c0_i32_1 = arith.constant 0 : i32
    return %arg0, %c0_i32, %c0_i32_0 : i32, i32, i32
  }
  func.func @transform_3(%arg0: i32) -> (i32, i32) {
    %c0_i32 = arith.constant 0 : i32
    %c0_i32_0 = arith.constant 0 : i32
    return %arg0, %c0_i32 : i32, i32
  }
}

</mosaic_0001>

<llo_original>
// kernel: tpu_custom_call.1
$region0: #{tpu_custom_call.1}
  #allocation0 [shape = 'u32[]', space=smem, size = 0x4, offset = 0x4, fixed_abs, tag = 'smem constant byte address 0x4 - core index']
  #allocation1 [shape = 'u32[72,128]{1,0:T(1,128)}', space=vmem, size = 0x9000, scoped, tag = 'internal scratch']
  %s0 = inlined_call_operand.vmem [shape: bf16[4,1,32], index: 0, kind: input, shape index: {}]
  %s1 = inlined_call_operand.vmem [shape: bf16[4,1,32], index: 1, kind: input, shape index: {}]
  %s2 = inlined_call_operand.vmem [shape: bf16[4,1,32], index: 2, kind: input, shape index: {}]
  %s3 = inlined_call_operand.vmem [shape: f32[4,1], index: 3, kind: output, shape index: {}]
  %s4 = sld [smem:[#allocation0]]
  $region22: #{tpu_custom_call.1} parent=0
    _
  %s6 = ssub.s32 1, %s4
  %s7 = scalar_select 0, %s6, %s4
  // Predicated region
  $region2: #{tpu_custom_call.1} parent=0 // pred_check
    _
  $region3: #{tpu_custom_call.1} parent=0 // pred_check_branch
    %9 = sbr.rel (0) target = $region5
  $region4: #{tpu_custom_call.1} parent=0 // pred_region
    _
  $region5: #{tpu_custom_call.1} parent=0 // pred_fallthru
    _
  // Predicated region
  $region6: #{tpu_custom_call.1} parent=0 // pred_check
    _
  $region7: #{tpu_custom_call.1} parent=0 // pred_check_branch
    %11 = sbr.rel (0) target = $region9
  $region8: #{tpu_custom_call.1} parent=0 // pred_region
    _
  $region9: #{tpu_custom_call.1} parent=0 // pred_fallthru
    _
  // Predicated region
  $region10: #{tpu_custom_call.1} parent=0 // pred_check
    _
  $region11: #{tpu_custom_call.1} parent=0 // pred_check_branch
    %13 = sbr.rel (0) target = $region13
  $region12: #{tpu_custom_call.1} parent=0 // pred_region
    _
  $region13: #{tpu_custom_call.1} parent=0 // pred_fallthru
    _
  %v14 = vld [vmem:[%s0] sm:$0x1]
  %v15 = vld [vmem:[%s0 + $0x1] sm:$0x1]
  %v16 = vld [vmem:[%s0 + $0x2] sm:$0x1]
  %v17 = vld [vmem:[%s0 + $0x3] sm:$0x1]
  %v18 = vunpack.c.l.bf16 %v14
  %v19 = vunpack.c.l.bf16 %v15
  %v20 = vunpack.c.l.bf16 %v16
  %v21 = vunpack.c.l.bf16 %v17
  %v22 = vld [vmem:[%s1] sm:$0x1]
  %v23 = vld [vmem:[%s1 + $0x1] sm:$0x1]
  %v24 = vld [vmem:[%s1 + $0x2] sm:$0x1]
  %v25 = vld [vmem:[%s1 + $0x3] sm:$0x1]
  %v26 = vunpack.c.l.bf16 %v22
  %v27 = vunpack.c.l.bf16 %v23
  %v28 = vunpack.c.l.bf16 %v24
  %v29 = vunpack.c.l.bf16 %v25
  %v30 = vld [vmem:[%s2] sm:$0x1]
  %v31 = vld [vmem:[%s2 + $0x1] sm:$0x1]
  %v32 = vld [vmem:[%s2 + $0x2] sm:$0x1]
  %v33 = vld [vmem:[%s2 + $0x3] sm:$0x1]
  %v34 = vunpack.c.l.bf16 %v30
  %v35 = vunpack.c.l.bf16 %v31
  %v36 = vunpack.c.l.bf16 %v32
  %v37 = vunpack.c.l.bf16 %v33
  %v38 = vadd.f32 %v18, %v26
  %v39 = vadd.f32 %v19, %v27
  %v40 = vadd.f32 %v20, %v28
  %v41 = vadd.f32 %v21, %v29
  %v42 = vsub.f32 %v38, %v34
  %v43 = vsub.f32 %v39, %v35
  %v44 = vsub.f32 %v40, %v36
  %v45 = vsub.f32 %v41, %v37
  %v46 = vand.u32 2147483647, %v42
  %v47 = vand.u32 2147483647, %v43
  %v48 = vand.u32 2147483647, %v44
  %v49 = vand.u32 2147483647, %v45
  %vm50 = vcmask 253952
  %v51 = vsel %vm50, %v46, 0.0
  %52 = vadd.xlane.f32.xlu0 %v51
  %v53 = vpop.xlane.xlu0 %52
  %v54 = vsel %vm50, %v47, 0.0
  %55 = vadd.xlane.f32.xlu0 %v54
  %v56 = vpop.xlane.xlu0 %55
  %v57 = vsel %vm50, %v48, 0.0
  %58 = vadd.xlane.f32.xlu0 %v57
  %v59 = vpop.xlane.xlu0 %58
  %v60 = vsel %vm50, %v49, 0.0
  %61 = vadd.xlane.f32.xlu0 %v60
  %v62 = vpop.xlane.xlu0 %61
  %v63 = vsub.f32 12.0, %v53
  %v64 = vsub.f32 12.0, %v56
  %v65 = vsub.f32 12.0, %v59
  %v66 = vsub.f32 12.0, %v62
  %v71 = vrot.slane %v64, 7
  %vm72 = vcmask 1041409
  %v73 = vsel %vm72, %v71, %v63
  %v74 = vrot.slane %v65, 6
  %vm75 = vcmask 1042434
  %v76 = vsel %vm75, %v74, %v73
  %v77 = vrot.slane %v66, 5
  %vm78 = vcmask 1043459
  %v79 = vsel %vm78, %v77, %v76
  %vm81 = vcmask 3072
  %82 = vst.msk [vmem:[%s3] sm:$0xf] %vm81, %v79
  // Predicated region
  $region14: #{tpu_custom_call.1} parent=0 // pred_check
    _
  $region15: #{tpu_custom_call.1} parent=0 // pred_check_branch
    %84 = sbr.rel (0) target = $region17
  $region16: #{tpu_custom_call.1} parent=0 // pred_region
    _
  $region17: #{tpu_custom_call.1} parent=0 // pred_fallthru
    _
  // Predicated region
  $region18: #{tpu_custom_call.1} parent=0 // pred_check
    _
  $region19: #{tpu_custom_call.1} parent=0 // pred_check_branch
    %86 = sbr.rel (0) target = $region21
  $region20: #{tpu_custom_call.1} parent=0 // pred_region
    _
  $region21: #{tpu_custom_call.1} parent=0 // pred_fallthru
    _

</llo_original>
